<compile_context>
chip_gen: v7x
topology: tpu7x:2x2x1
jax: 0.10.0
libtpu: 0.0.40
codegen_flags: <defaults>
</compile_context>

<pallas_src>
import jax
import jax.numpy as jnp
from jax import lax
from jax.experimental import pallas as pl
from jax.experimental.pallas import tpu as pltpu


def _output_head_kernel(x_ref, w_ref, b_ref, o_ref, acc_ref):
    """Computes one (tm, tn) logits tile, accumulating over the K grid axis."""
    k = pl.program_id(2)

    @pl.when(k == 0)
    def _init():
        acc_ref[...] = jnp.zeros_like(acc_ref)

    x = x_ref[...]
    w = w_ref[...]
    if x.dtype != w.dtype:                 # e.g. f32 activations, bf16 weights
        x = x.astype(w.dtype)
    # x @ w.T on the MXU with f32 accumulation.  (If bit-parity with f32
    # PyTorch matters, add precision=lax.Precision.HIGHEST at ~3-6x MXU cost.)
    acc_ref[...] += lax.dot_general(
        x, w,
        dimension_numbers=(((1,), (1,)), ((), ())),
        preferred_element_type=jnp.float32,
    )

    @pl.when(k == pl.num_programs(2) - 1)
    def _flush():
        o_ref[...] = (
            acc_ref[...] + b_ref[...].astype(jnp.float32)
        ).astype(o_ref.dtype)


def _vmem_budget_bytes():
    """~75% of per-core VMEM capacity (48 MiB on v7x, 96 MiB on v5e/v6e)."""
    cap = 64 * 1024 * 1024                 # conservative fallback (v7x per-TC)
    try:
        info = pltpu.get_tpu_info()
        cap = int(getattr(info, "vmem_capacity_bytes", cap)) or cap
    except Exception:
        pass
    return max(min(cap * 3 // 4, 100 << 20), 24 << 20)


def _select_tiles(M, E, V, x_bytes, w_bytes, out_bytes, bias_bytes, budget):
    """Pick (tm, tk, tn) so the pipelined working set fits `budget` bytes.

    Grid layout is (V, M, K): the weight tile is resident across the inner M
    axis whenever tk == E (weight streamed from HBM exactly once), and x is
    re-streamed once per vocab tile only when M (or K) is tiled, so tn gets
    the largest share of VMEM.  K is split only when a full-K slab cannot fit
    and must divide E exactly (ragged contraction blocks are not maskable).
    """

    def footprint(tm, tk, tn):
        return (2 * tm * tk * x_bytes        # x tile, double buffered
                + 2 * tn * tk * w_bytes      # weight tile, double buffered
                + 2 * tm * tn * out_bytes    # output tile, double buffered
                + tm * tn * 4                # f32 accumulator scratch
                + 2 * tn * bias_bytes)       # bias tile

    # K: full E strongly preferred; otherwise multiples of 128 dividing E.
    tk_cands = [E]
    if E % 128 == 0:
        tk_cands += [t for t in (8192, 4096, 2048, 1024, 512, 256, 128)
                     if t < E and E % t == 0]

    # Vocab tile: multiples of 128 not exceeding V (full V if V < 128).
    if V >= 128:
        n_cap = min((V // 128) * 128, 4096)
        tn_cands = list(range(n_cap, 0, -128))
    else:
        tn_cands = [V]

    # M tile: a single resident tile when M is small (x then streams once);
    # otherwise a moderate tile -- in this layout tm does not change weight
    # traffic, it only needs to keep the MXU / per-step overhead amortized.
    if M <= 1024:
        tm_cands = [M] + [t for t in (512, 256, 128, 64, 32, 16, 8) if t < M]
    else:
        tm_cands = [512, 256, 128, 64, 32, 16, 8]

    min_tn = min(256, tn_cands[0])
    for relax in (False, True):
        for tk in tk_cands:
            for tm in tm_cands:
                for tn in tn_cands:
                    if not relax and tn < min_tn:
                        continue
                    if footprint(tm, tk, tn) <= budget:
                        return tm, tk, tn
    return tm_cands[-1], tk_cands[-1], tn_cands[-1]


@jax.jit
def output_head(hidden_states, weight, bias):
    """logits = hidden_states @ weight.T + bias  (PyTorch nn.Linear semantics).

    hidden_states: (B, S, E)
    weight:        (V, E)  -- native PyTorch nn.Linear layout (not transposed)
    bias:          (V,)
    returns:       (B, S, V) in hidden_states.dtype
    """
    B, S, E = hidden_states.shape
    V, E_w = weight.shape
    assert E == E_w, "weight must be (vocab_size, embedding_dim)"
    assert bias.shape == (V,)

    x = hidden_states.reshape(B * S, E)
    M = B * S
    out_dtype = hidden_states.dtype

    xb = x.dtype.itemsize
    wb = weight.dtype.itemsize
    ob = jnp.dtype(out_dtype).itemsize
    bb = bias.dtype.itemsize

    budget = _vmem_budget_bytes()
    tm, tk, tn = _select_tiles(M, E, V, xb, wb, ob, bb, budget - (4 << 20))

    nv = pl.cdiv(V, tn)
    nm = pl.cdiv(M, tm)
    nk = pl.cdiv(E, tk)
    grid = (nv, nm, nk)   # vocab outermost (parallel), K innermost (accumulate)

    b2 = bias.reshape(1, V)

    footprint = (2 * tm * tk * xb + 2 * tn * tk * wb + 2 * tm * tn * ob
                 + tm * tn * 4 + 2 * tn * bb)
    vmem_limit = int(min(budget, max(footprint + (4 << 20), 32 << 20)))

    # Honest HBM-traffic estimate: x is re-streamed once per vocab tile when M
    # or K is tiled; the weight is re-streamed per M tile only when K is tiled.
    x_passes = nv if (nm * nk) > 1 else 1
    w_passes = nm if nk > 1 else 1
    cost = pl.CostEstimate(
        flops=2 * M * E * V,
        transcendentals=0,
        bytes_accessed=(x_passes * M * E * xb + w_passes * V * E * wb
                        + V * bb + M * V * ob),
    )

    out = pl.pallas_call(
        _output_head_kernel,
        out_shape=jax.ShapeDtypeStruct((M, V), out_dtype),
        grid_spec=pltpu.PrefetchScalarGridSpec(
            num_scalar_prefetch=0,
            grid=grid,
            in_specs=[
                # Activations: indexed by (M, K) only; when M and K are both
                # untiled it is fetched exactly once for the whole call.
                pl.BlockSpec((tm, tk), lambda j, i, k: (i, k)),
                # Weight slab in native (V, E) layout; resident across the
                # inner M axis whenever K is untiled (nk == 1).
                pl.BlockSpec((tn, tk), lambda j, i, k: (j, k)),
                # Bias: block index depends only on the outermost vocab axis,
                # so it is fetched once per vocab tile, not per grid step.
                pl.BlockSpec((1, tn), lambda j, i, k: (0, j)),
            ],
            out_specs=pl.BlockSpec((tm, tn), lambda j, i, k: (i, j)),
            scratch_shapes=[pltpu.VMEM((tm, tn), jnp.float32)],
        ),
        compiler_params=pltpu.CompilerParams(
            # Vocab axis parallel -> v7x megacore shards the vocab, so each
            # core streams a disjoint slice of the weight; M / K sequential.
            dimension_semantics=("parallel", "arbitrary", "arbitrary"),
            vmem_limit_bytes=vmem_limit,
        ),
        cost_estimate=cost,
    )(x, weight, b2)

    return out.reshape(B, S, V)


if __name__ == "__main__":
    batch, seq, embedding_dim, vocab_size = 2, 8, 32, 256

    key = jax.random.PRNGKey(0)
    k_x, k_w, k_b = jax.random.split(key, 3)

    # Deterministic params mimicking nn.Linear init (uniform +/- 1/sqrt(fan_in)).
    bound = 1.0 / (embedding_dim ** 0.5)
    weight = jax.random.uniform(
        k_w, (vocab_size, embedding_dim), jnp.float32, -bound, bound)
    bias = jax.random.uniform(k_b, (vocab_size,), jnp.float32, -bound, bound)
    hidden_states = jax.random.normal(
        k_x, (batch, seq, embedding_dim), jnp.float32)

    # f32 path: matches the PyTorch module (weight kept in (V, E) layout).
    logits = jax.block_until_ready(output_head(hidden_states, weight, bias))
    ref = hidden_states @ weight.T + bias
    assert logits.shape == (batch, seq, vocab_size)
    assert jnp.allclose(logits, ref, atol=1e-4, rtol=1e-4)

    # bf16-weight path (recommended production config: pre-cast the weight at
    # parameter-load time; the kernel casts activations in-VMEM and keeps f32
    # accumulation).  Loose tolerance: bf16 operand rounding only.
    logits_bf16 = jax.block_until_ready(
        output_head(hidden_states, weight.astype(jnp.bfloat16), bias))
    assert jnp.allclose(logits_bf16, ref, atol=0.2, rtol=0.0)

    print("KERNEL_OK")
</pallas_src>

<mosaic_0001>
module attributes {stable_mosaic.version = 11 : i64} {
  func.func @_output_head_kernel(%arg0: i32, %arg1: i32, %arg2: i32, %arg3: memref<16x32xf32, #tpu.memory_space<vmem>>, %arg4: memref<256x32xf32, #tpu.memory_space<vmem>>, %arg5: memref<1x256xf32, #tpu.memory_space<vmem>>, %arg6: memref<16x256xf32, #tpu.memory_space<vmem>>, %arg7: memref<16x256xf32, #tpu.memory_space<vmem>>) attributes {dimension_semantics = [#tpu.dimension_semantics<parallel>, #tpu.dimension_semantics<arbitrary>, #tpu.dimension_semantics<arbitrary>], iteration_bounds = array<i64: 1, 1, 1>, scalar_prefetch = 0 : i64, scratch_operands = 1 : i64, tpu.core_type = #tpu.core_type<tc>, window_params = [{transform_indices = @transform_0, window_bounds = array<i64: 16, 32>}, {transform_indices = @transform_1, window_bounds = array<i64: 256, 32>}, {transform_indices = @transform_2, window_bounds = array<i64: 1, 256>}, {transform_indices = @transform_3, window_bounds = array<i64: 16, 256>}]} {
    %c0_i32 = arith.constant 0 : i32
    %0 = arith.cmpi eq, %arg2, %c0_i32 : i32
    %1 = arith.extui %0 : i1 to i32
    %c0_i32_0 = arith.constant 0 : i32
    %2 = arith.cmpi ne, %1, %c0_i32_0 : i32
    scf.if %2 {
      %cst_10 = arith.constant 0.000000e+00 : f32
      %12 = vector.broadcast %cst_10 : f32 to vector<16x256xf32>
      %c0_11 = arith.constant 0 : index
      %c0_12 = arith.constant 0 : index
      %13 = vector.load %arg7[%c0_11, %c0_12] : memref<16x256xf32, #tpu.memory_space<vmem>>, vector<16x256xf32>
      tpu.vector_store %arg7[%c0_11, %c0_12], %12 {strides = array<i32>} : memref<16x256xf32, #tpu.memory_space<vmem>>, vector<16x256xf32>,
    } else {
    }
    %c0 = arith.constant 0 : index
    %c0_1 = arith.constant 0 : index
    %3 = vector.load %arg3[%c0, %c0_1] : memref<16x32xf32, #tpu.memory_space<vmem>>, vector<16x32xf32>
    %c0_2 = arith.constant 0 : index
    %c0_3 = arith.constant 0 : index
    %4 = vector.load %arg4[%c0_2, %c0_3] : memref<256x32xf32, #tpu.memory_space<vmem>>, vector<256x32xf32>
    %c0_4 = arith.constant 0 : index
    %c0_5 = arith.constant 0 : index
    %5 = vector.load %arg7[%c0_4, %c0_5] : memref<16x256xf32, #tpu.memory_space<vmem>>, vector<16x256xf32>
    %cst = arith.constant dense<0.000000e+00> : vector<16x256xf32>
    %6 = tpu.matmul %3, %4, %cst {dimension_numbers = #tpu.dot_dimension_numbers<[1], [1], [0], [0], [0, 0, 1, 0], [], []>} : vector<16x32xf32>, vector<256x32xf32>, vector<16x256xf32> -> vector<16x256xf32>
    %7 = arith.addf %5, %6 : vector<16x256xf32>
    %c0_6 = arith.constant 0 : index
    %c0_7 = arith.constant 0 : index
    %8 = vector.load %arg7[%c0_6, %c0_7] : memref<16x256xf32, #tpu.memory_space<vmem>>, vector<16x256xf32>
    tpu.vector_store %arg7[%c0_6, %c0_7], %7 {strides = array<i32>} : memref<16x256xf32, #tpu.memory_space<vmem>>, vector<16x256xf32>,
    %c0_i32_8 = arith.constant 0 : i32
    %9 = arith.cmpi eq, %arg2, %c0_i32_8 : i32
    %10 = arith.extui %9 : i1 to i32
    %c0_i32_9 = arith.constant 0 : i32
    %11 = arith.cmpi ne, %10, %c0_i32_9 : i32
    scf.if %11 {
      %c0_10 = arith.constant 0 : index
      %c0_11 = arith.constant 0 : index
      %12 = vector.load %arg7[%c0_10, %c0_11] : memref<16x256xf32, #tpu.memory_space<vmem>>, vector<16x256xf32>
      %c0_12 = arith.constant 0 : index
      %c0_13 = arith.constant 0 : index
      %13 = vector.load %arg5[%c0_12, %c0_13] : memref<1x256xf32, #tpu.memory_space<vmem>>, vector<1x256xf32>
      %14 = vector.broadcast %13 : vector<1x256xf32> to vector<16x256xf32>
      %15 = arith.addf %12, %14 : vector<16x256xf32>
      %c0_14 = arith.constant 0 : index
      %c0_15 = arith.constant 0 : index
      %16 = vector.load %arg6[%c0_14, %c0_15] : memref<16x256xf32, #tpu.memory_space<vmem>>, vector<16x256xf32>
      tpu.vector_store %arg6[%c0_14, %c0_15], %15 {strides = array<i32>} : memref<16x256xf32, #tpu.memory_space<vmem>>, vector<16x256xf32>,
    } else {
    }
    return
  }
  func.func @transform_0(%arg0: i32, %arg1: i32, %arg2: i32) -> (i32, i32) {
    %c0_i32 = arith.constant 0 : i32
    return %arg1, %arg2 : i32, i32
  }
  func.func @transform_1(%arg0: i32, %arg1: i32, %arg2: i32) -> (i32, i32) {
    %c0_i32 = arith.constant 0 : i32
    return %arg0, %arg2 : i32, i32
  }
  func.func @transform_2(%arg0: i32, %arg1: i32, %arg2: i32) -> (i32, i32) {
    %c0_i32 = arith.constant 0 : i32
    %c0_i32_0 = arith.constant 0 : i32
    return %c0_i32, %arg0 : i32, i32
  }
  func.func @transform_3(%arg0: i32, %arg1: i32, %arg2: i32) -> (i32, i32) {
    %c0_i32 = arith.constant 0 : i32
    return %arg1, %arg0 : i32, i32
  }
}

</mosaic_0001>

<llo_original>
// kernel: output_head.1
$region0: #{output_head.1}
  #allocation0 [shape = 'u32[]', space=smem, size = 0x4, offset = 0x4, fixed_abs, tag = 'smem constant byte address 0x4 - core index']
  #allocation1 [shape = 'u32[144,128]{1,0:T(1,128)}', space=vmem, size = 0x12000, scoped, tag = 'internal scratch']
  #allocation2 [shape = 'f32[16,256]{1,0:T(8,128)}', space=vmem, size = 0x4000, scoped, tag = 'scratch operand']
  %s0 = inlined_call_operand.vmem [shape: f32[16,32], index: 0, kind: input, shape index: {}]
  %s1 = inlined_call_operand.vmem [shape: f32[256,32], index: 1, kind: input, shape index: {}]
  %s2 = inlined_call_operand.vmem [shape: f32[1,256], index: 2, kind: input, shape index: {}]
  %s3 = inlined_call_operand.hbm [shape: f32[16,256], index: 3, kind: output, shape index: {}]
  %s4 = sld [smem:[#allocation0]]
  $region30: #{output_head.1} parent=0
    _
  %s6 = ssub.s32 1, %s4
  %s7 = scalar_select 0, %s6, %s4
  $region1: #{output_head.1} parent=0
    #allocation3 [shape = 'u8[16384]{0}', space=vmem, size = 0x4000, scoped, tag = 'output window, operand 0, single buffered']
    #allocation4 [shape = 's32[1]{0}', space=sflag, size = 0x4, scoped, tag = 'scoped memory for output_head.1']
    %8 = vsyncpa [#allocation4], 0
    // Predicated region
    $region2: #{output_head.1} parent=1 // pred_check
      _
    $region3: #{output_head.1} parent=1 // pred_check_branch
      %10 = sbr.rel (0) target = $region5
    $region4: #{output_head.1} parent=1 // pred_region
      _
    $region5: #{output_head.1} parent=1 // pred_fallthru
      _
    // Predicated region
    $region6: #{output_head.1} parent=1 // pred_check
      _
    $region7: #{output_head.1} parent=1 // pred_check_branch
      %12 = sbr.rel (0) target = $region9
    $region8: #{output_head.1} parent=1 // pred_region
      _
    $region9: #{output_head.1} parent=1 // pred_fallthru
      _
    // Predicated region
    $region10: #{output_head.1} parent=1 // pred_check
      _
    $region11: #{output_head.1} parent=1 // pred_check_branch
      %14 = sbr.rel (0) target = $region13
    $region12: #{output_head.1} parent=1 // pred_region
      _
    $region13: #{output_head.1} parent=1 // pred_fallthru
      _
    %p15 = scmp.eq.s32.totalorder 0, 0
    // Predicated region
    $region14: #{output_head.1} parent=1 // pred_check
      %p16 = pneg %p15
    $region15: #{output_head.1} parent=1 // pred_check_branch
      %18 = sbr.rel (%p16) target = $region17
    $region16: #{output_head.1} parent=1 // pred_region
      %19 = vst [vmem:[#allocation2] sm:$0xff] 0.0
      %20 = vst [vmem:[#allocation2 + $0x8] sm:$0xff] 0.0
      %21 = vst [vmem:[#allocation2 + $0x10] sm:$0xff] 0.0
      %22 = vst [vmem:[#allocation2 + $0x18] sm:$0xff] 0.0
    $region17: #{output_head.1} parent=1 // pred_fallthru
      _
    %v23 = vld [vmem:[%s0] sm:$0xff]
    %v24 = vld [vmem:[%s0 + $0x8] sm:$0xff]
    %v25 = vld [vmem:[%s1] sm:$0xff]
    %v26 = vld [vmem:[%s1 + $0x8] sm:$0xff]
    %v27 = vld [vmem:[%s1 + $0x10] sm:$0xff]
    %v28 = vld [vmem:[%s1 + $0x18] sm:$0xff]
    %v29 = vld [vmem:[%s1 + $0x20] sm:$0xff]
    %v30 = vld [vmem:[%s1 + $0x28] sm:$0xff]
    %v31 = vld [vmem:[%s1 + $0x30] sm:$0xff]
    %v32 = vld [vmem:[%s1 + $0x38] sm:$0xff]
    %v33 = vld [vmem:[%s1 + $0x40] sm:$0xff]
    %v34 = vld [vmem:[%s1 + $0x48] sm:$0xff]
    %v35 = vld [vmem:[%s1 + $0x50] sm:$0xff]
    %v36 = vld [vmem:[%s1 + $0x58] sm:$0xff]
    %v37 = vld [vmem:[%s1 + $0x60] sm:$0xff]
    %v38 = vld [vmem:[%s1 + $0x68] sm:$0xff]
    %v39 = vld [vmem:[%s1 + $0x70] sm:$0xff]
    %v40 = vld [vmem:[%s1 + $0x78] sm:$0xff]
    %v41 = vld [vmem:[%s1 + $0x80] sm:$0xff]
    %v42 = vld [vmem:[%s1 + $0x88] sm:$0xff]
    %v43 = vld [vmem:[%s1 + $0x90] sm:$0xff]
    %v44 = vld [vmem:[%s1 + $0x98] sm:$0xff]
    %v45 = vld [vmem:[%s1 + $0xa0] sm:$0xff]
    %v46 = vld [vmem:[%s1 + $0xa8] sm:$0xff]
    %v47 = vld [vmem:[%s1 + $0xb0] sm:$0xff]
    %v48 = vld [vmem:[%s1 + $0xb8] sm:$0xff]
    %v49 = vld [vmem:[%s1 + $0xc0] sm:$0xff]
    %v50 = vld [vmem:[%s1 + $0xc8] sm:$0xff]
    %v51 = vld [vmem:[%s1 + $0xd0] sm:$0xff]
    %v52 = vld [vmem:[%s1 + $0xd8] sm:$0xff]
    %v53 = vld [vmem:[%s1 + $0xe0] sm:$0xff]
    %v54 = vld [vmem:[%s1 + $0xe8] sm:$0xff]
    %v55 = vld [vmem:[%s1 + $0xf0] sm:$0xff]
    %v56 = vld [vmem:[%s1 + $0xf8] sm:$0xff]
    %v57 = vld [vmem:[#allocation2] sm:$0xff]
    %v58 = vld [vmem:[#allocation2 + $0x8] sm:$0xff]
    %v59 = vld [vmem:[#allocation2 + $0x10] sm:$0xff]
    %v60 = vld [vmem:[#allocation2 + $0x18] sm:$0xff]
    %vm61 = vcmask 261120
    %v63 = vsel %vm61, %v23, 0
    %v66 = vsel %vm61, %v24, 0
    %v69 = vsel %vm61, %v25, 0
    %v72 = vsel %vm61, %v26, 0
    %v75 = vsel %vm61, %v27, 0
    %v78 = vsel %vm61, %v28, 0
    %v81 = vsel %vm61, %v29, 0
    %v84 = vsel %vm61, %v30, 0
    %v87 = vsel %vm61, %v31, 0
    %v90 = vsel %vm61, %v32, 0
    %v93 = vsel %vm61, %v33, 0
    %v96 = vsel %vm61, %v34, 0
    %v99 = vsel %vm61, %v35, 0
    %v102 = vsel %vm61, %v36, 0
    %v105 = vsel %vm61, %v37, 0
    %v108 = vsel %vm61, %v38, 0
    %v111 = vsel %vm61, %v39, 0
    %v114 = vsel %vm61, %v40, 0
    %v117 = vsel %vm61, %v41, 0
    %v120 = vsel %vm61, %v42, 0
    %v123 = vsel %vm61, %v43, 0
    %v126 = vsel %vm61, %v44, 0
    %v129 = vsel %vm61, %v45, 0
    %v132 = vsel %vm61, %v46, 0
    %v135 = vsel %vm61, %v47, 0
    %v138 = vsel %vm61, %v48, 0
    %v141 = vsel %vm61, %v49, 0
    %v144 = vsel %vm61, %v50, 0
    %v147 = vsel %vm61, %v51, 0
    %v150 = vsel %vm61, %v52, 0
    %v153 = vsel %vm61, %v53, 0
    %v156 = vsel %vm61, %v54, 0
    %v159 = vsel %vm61, %v55, 0
    %v162 = vsel %vm61, %v56, 0
    %164 = vmatprep.subr.mxu0 0.0
    %165 = vmatpush1.xpose.msra.mxu0 %v69
    %166 = vmatprep.subr.mxu0 0.0
    %167 = vmatpush1.xpose.msra.mxu0 %v72
    %168 = vmatprep.subr.mxu0 0.0
    %169 = vmatpush1.xpose.msra.mxu0 %v75
    %170 = vmatprep.subr.mxu0 0.0
    %171 = vmatpush1.xpose.msra.mxu0 %v78
    %172 = vmatprep.subr.mxu0 0.0
    %173 = vmatpush1.xpose.msra.mxu0 %v81
    %174 = vmatprep.subr.mxu0 0.0
    %175 = vmatpush1.xpose.msra.mxu0 %v84
    %176 = vmatprep.subr.mxu0 0.0
    %177 = vmatpush1.xpose.msra.mxu0 %v87
    %178 = vmatprep.subr.mxu0 0.0
    %179 = vmatpush1.xpose.msra.mxu0 %v90
    %180 = vmatprep.subr.mxu0 0.0
    %181 = vmatpush1.xpose.msra.mxu0 %v93
    %182 = vmatprep.subr.mxu0 0.0
    %183 = vmatpush1.xpose.msra.mxu0 %v96
    %184 = vmatprep.subr.mxu0 0.0
    %185 = vmatpush1.xpose.msra.mxu0 %v99
    %186 = vmatprep.subr.mxu0 0.0
    %187 = vmatpush1.xpose.msra.mxu0 %v102
    %188 = vmatprep.subr.mxu0 0.0
    %189 = vmatpush1.xpose.msra.mxu0 %v105
    %190 = vmatprep.subr.mxu0 0.0
    %191 = vmatpush1.xpose.msra.mxu0 %v108
    %192 = vmatprep.subr.mxu0 0.0
    %193 = vmatpush1.xpose.msra.mxu0 %v111
    %194 = vmatprep.subr.mxu0 0.0
    %195 = vmatpush1.xpose.msra.mxu0 %v114
    %196 = vmatprep.subr.mxu0 0.0
    %197 = vmatpush1.xpose.msra.mxu0 %v117
    %198 = vmatprep.subr.mxu0 0.0
    %199 = vmatpush1.xpose.msra.mxu0 %v120
    %200 = vmatprep.subr.mxu0 0.0
    %201 = vmatpush1.xpose.msra.mxu0 %v123
    %202 = vmatprep.subr.mxu0 0.0
    %203 = vmatpush1.xpose.msra.mxu0 %v126
    %204 = vmatprep.subr.mxu0 0.0
    %205 = vmatpush1.xpose.msra.mxu0 %v129
    %206 = vmatprep.subr.mxu0 0.0
    %207 = vmatpush1.xpose.msra.mxu0 %v132
    %208 = vmatprep.subr.mxu0 0.0
    %209 = vmatpush1.xpose.msra.mxu0 %v135
    %210 = vmatprep.subr.mxu0 0.0
    %211 = vmatpush1.xpose.msra.mxu0 %v138
    %212 = vmatprep.subr.mxu0 0.0
    %213 = vmatpush1.xpose.msra.mxu0 %v141
    %214 = vmatprep.subr.mxu0 0.0
    %215 = vmatpush1.xpose.msra.mxu0 %v144
    %216 = vmatprep.subr.mxu0 0.0
    %217 = vmatpush1.xpose.msra.mxu0 %v147
    %218 = vmatprep.subr.mxu0 0.0
    %219 = vmatpush1.xpose.msra.mxu0 %v150
    %220 = vmatprep.subr.mxu0 0.0
    %221 = vmatpush1.xpose.msra.mxu0 %v153
    %222 = vmatprep.subr.mxu0 0.0
    %223 = vmatpush1.xpose.msra.mxu0 %v156
    %224 = vmatprep.subr.mxu0 0.0
    %225 = vmatpush1.xpose.msra.mxu0 %v159
    %226 = vmatprep.subr.mxu0 0.0
    %227 = vmatpush1.xpose.msra.mxu0 %v162
    %228 = vmatprep.mubr.f32.mxu0 0.0
    %229 = vmatmul.mubr.f32.gmra.mrb[0].mxu0 %v63
    %v230 = vpop.f32.mrb[0].mxu0
    %v231 = vadd.f32 0.0, %v230
    %v232 = vpop.f32.mrb[0].mxu0
    %v233 = vadd.f32 0.0, %v232
    %234 = vmatprep.mubr.f32.mxu0 0.0
    %235 = vmatmul.mubr.f32.gmra.mrb[0].mxu0 %v66
    %v236 = vpop.f32.mrb[0].mxu0
    %v237 = vadd.f32 0.0, %v236
    %v238 = vpop.f32.mrb[0].mxu0
    %v239 = vadd.f32 0.0, %v238
    %240 = vdwg.mxu0
    %v241 = vadd.f32 %v57, %v231
    %v242 = vadd.f32 %v58, %v233
    %v243 = vadd.f32 %v59, %v237
    %v244 = vadd.f32 %v60, %v239
    %245 = vst [vmem:[#allocation2] sm:$0xff] %v241
    %246 = vst [vmem:[#allocation2 + $0x8] sm:$0xff] %v242
    %247 = vst [vmem:[#allocation2 + $0x10] sm:$0xff] %v243
    %248 = vst [vmem:[#allocation2 + $0x18] sm:$0xff] %v244
    // Predicated region
    $region18: #{output_head.1} parent=1 // pred_check
      %p249 = pneg %p15
    $region19: #{output_head.1} parent=1 // pred_check_branch
      %251 = sbr.rel (%p249) target = $region21
    $region20: #{output_head.1} parent=1 // pred_region
      %v252 = vld [vmem:[#allocation2] sm:$0xff]
      %v253 = vld [vmem:[#allocation2 + $0x8] sm:$0xff]
      %v254 = vld [vmem:[#allocation2 + $0x10] sm:$0xff]
      %v255 = vld [vmem:[#allocation2 + $0x18] sm:$0xff]
      %v256 = vld [vmem:[%s2] sm:$0x3]
      %v258 = vlaneseq
      %v259 = vshrl.u32 %v258, 7
      %v260 = vsub.s32 0, %v259
      %v261 = vrot.slane %v256, %v260
      %v262 = vlaneseq
      %v263 = vshrl.u32 %v262, 7
      %v264 = vsub.s32 1, %v263
      %v265 = vrot.slane %v256, %v264
      %v268 = vadd.f32 %v252, %v261
      %v269 = vadd.f32 %v253, %v265
      %v270 = vadd.f32 %v254, %v261
      %v271 = vadd.f32 %v255, %v265
      %272 = vst [vmem:[#allocation3] sm:$0xff] %v268
      %273 = vst [vmem:[#allocation3 + $0x8] sm:$0xff] %v269
      %274 = vst [vmem:[#allocation3 + $0x10] sm:$0xff] %v270
      %275 = vst [vmem:[#allocation3 + $0x18] sm:$0xff] %v271
    $region21: #{output_head.1} parent=1 // pred_fallthru
      _
    // Predicated region
    $region22: #{output_head.1} parent=1 // pred_check
      _
    $region23: #{output_head.1} parent=1 // pred_check_branch
      %277 = sbr.rel (0) target = $region25
    $region24: #{output_head.1} parent=1 // pred_region
      %s279 = ssub.s32 512, 512
      %280 = vsyncadd [#allocation4], %s279
      %s281 = sshll.u32 [#allocation3], 4
      %s282 = int_to_ptr.vmem [resolvable:$true] %s281
      %287 = dma.vmem_to_hbm [thread:$0]  %s282, 512, %s3, [#allocation4], 256, 256, 16
    $region25: #{output_head.1} parent=1 // pred_fallthru
      _
    // Predicated region
    $region26: #{output_head.1} parent=1 // pred_check
      _
    $region27: #{output_head.1} parent=1 // pred_check_branch
      %289 = sbr.rel (0) target = $region29
    $region28: #{output_head.1} parent=1 // pred_region
      %290 = dma.done [#allocation4], 512
    $region29: #{output_head.1} parent=1 // pred_fallthru
      _
    %291 = vsyncpa [#allocation4], 1

</llo_original>
